<compile_context>
chip_gen: v5e
topology: v5e:2x2
jax: 0.10.0
libtpu: 0.0.40
codegen_flags: <defaults>
</compile_context>

<pallas_src>
import functools

import jax
import jax.numpy as jnp
from jax.experimental import pallas as pl
from jax.experimental.pallas import tpu as pltpu


# --------------------------------------------------------------------------- #
# Hardware-aware budgets
# --------------------------------------------------------------------------- #
def _vmem_capacity_bytes():
    try:
        return int(pltpu.get_tpu_info().vmem_capacity_bytes)
    except Exception:
        return 64 * 1024 * 1024  # conservative fallback (v7x physical VMEM)


# --------------------------------------------------------------------------- #
# Weight prep (9 tiny 1x1 convs -> 3 concatenated matmuls)
# TODO(synk): hoist this prep to module init in a real deployment; under jit it
#             is tiny and fused, but it still re-traces the concat per call.
# --------------------------------------------------------------------------- #
def _prep_weights_row(params):
    """(in, out) layout, concatenated along the OUTPUT dim (for (B,C)@(C,N))."""
    t = lambda k: jnp.asarray(params[k], jnp.float32).T
    w0 = jnp.concatenate([t("w0_1"), t("w01"), t("w02"), t("w03")], axis=1)  # (C, 3cr+C)
    w1 = jnp.concatenate([t("w0_2"), t("w12"), t("w13")], axis=1)            # (cr, 2cr+C)
    w2 = jnp.concatenate([t("w0_3"), t("w23")], axis=1)                      # (cr, 2C)
    return w0, w1, w2


def _prep_weights_col(params):
    """(out, in) layout, concatenated along the OUTPUT dim (for (N,C)@(C,1))."""
    f = lambda k: jnp.asarray(params[k], jnp.float32)
    w0 = jnp.concatenate([f("w0_1"), f("w01"), f("w02"), f("w03")], axis=0)  # (3cr+C, C)
    w1 = jnp.concatenate([f("w0_2"), f("w12"), f("w13")], axis=0)            # (2cr+C, cr)
    w2 = jnp.concatenate([f("w0_3"), f("w23")], axis=0)                      # (2C, cr)
    return w0, w1, w2


# --------------------------------------------------------------------------- #
# Kernels
# --------------------------------------------------------------------------- #
def _fused_kernel(x_ref, w0_ref, w1_ref, w2_ref, o_ref, *, inv_hw, C, cr):
    """Pool + dense-connected channel MLP + sigmoid + scale on one resident
    (1, C, HW) block.  Column orientation keeps channels on sublanes throughout
    (no lane<->sublane relayouts)."""
    x = x_ref[...]                                                        # (1, C, HW)
    p = jnp.sum(x.astype(jnp.float32), axis=-1, keepdims=True)[0] * inv_hw  # (C, 1)

    l0 = jnp.dot(w0_ref[...], p, preferred_element_type=jnp.float32)     # (3cr+C, 1)
    y = jnp.maximum(l0[:cr] + l0[cr:2 * cr], 0.0)                        # relu0
    l1 = jnp.dot(w1_ref[...], y, preferred_element_type=jnp.float32)     # (2cr+C, 1)
    y = jnp.maximum(l1[:cr] + l0[2 * cr:3 * cr] + l1[cr:2 * cr], 0.0)    # relu1
    l2 = jnp.dot(w2_ref[...], y, preferred_element_type=jnp.float32)     # (2C, 1)
    gate = jax.nn.sigmoid(l2[:C] + l0[3 * cr:] + l1[2 * cr:] + l2[C:])   # (C, 1)

    o_ref[...] = x * gate[None].astype(x.dtype)                          # lane bcast


def _pool_kernel(x_ref, out_ref, *, hw, inv_hw):
    """Accumulate the spatial sum into the resident (1, C, 1) output block;
    the ragged last tile is masked in-kernel (no wrapper-side padding)."""
    t = pl.program_id(1)

    @pl.when(t == 0)
    def _():
        out_ref[...] = jnp.zeros_like(out_ref)

    x = x_ref[...].astype(jnp.float32)                      # (1, C, thw)
    thw = x.shape[-1]
    lane = jax.lax.broadcasted_iota(jnp.int32, x.shape, 2)
    x = jnp.where(lane + t * thw < hw, x, 0.0)              # mask pad lanes
    out_ref[...] += jnp.sum(x, axis=-1, keepdims=True)      # (1, C, 1)

    @pl.when(t == pl.num_programs(1) - 1)
    def _():
        out_ref[...] = out_ref[...] * inv_hw


def _gate_kernel(p_ref, w0_ref, w1_ref, w2_ref, o_ref, *, C, cr):
    """Dense-connected channel MLP + sigmoid, batched across B, 3 wide matmuls."""
    p = p_ref[...].astype(jnp.float32)                                   # (B, C)
    l0 = jnp.dot(p, w0_ref[...], preferred_element_type=jnp.float32)     # (B, 3cr+C)
    y = jnp.maximum(l0[:, :cr] + l0[:, cr:2 * cr], 0.0)                  # relu0
    l1 = jnp.dot(y, w1_ref[...], preferred_element_type=jnp.float32)     # (B, 2cr+C)
    y = jnp.maximum(l1[:, :cr] + l0[:, 2 * cr:3 * cr] + l1[:, cr:2 * cr], 0.0)
    l2 = jnp.dot(y, w2_ref[...], preferred_element_type=jnp.float32)     # (B, 2C)
    o_ref[...] = jax.nn.sigmoid(l2[:, :C] + l0[:, 3 * cr:] + l1[:, 2 * cr:] + l2[:, C:])


def _scale_kernel(x_ref, g_ref, o_ref):
    """o = x * gate; gate block is (1, C, 1): per-channel lane broadcast.
    Multiply in x's dtype (bf16 stays bf16 on v6e/v7x)."""
    o_ref[...] = x_ref[...] * g_ref[...].astype(o_ref.dtype)


# --------------------------------------------------------------------------- #
# Wrapper
# --------------------------------------------------------------------------- #
def _choose_hw_tile(C, HW, itemsize, budget_bytes):
    """Largest multiple-of-128 lane extent under the VMEM budget; grid uses
    cdiv so no divisibility constraint (ragged tail handled in-kernel)."""
    lanes = max(128, (budget_bytes // max(1, C * itemsize)) // 128 * 128)
    return min(pl.cdiv(HW, 128) * 128, lanes)


def cda_layer(x, params, *, fused=None, tile_budget_bytes=None):
    """x: (B, C, H, W); params: dict of 1x1-conv weights with shape (out, in)."""
    B, C, H, W = x.shape
    HW = H * W
    cr = params["w0_1"].shape[0]
    itemsize = x.dtype.itemsize

    xf = x.reshape(B, C, HW)                       # metadata-only
    cap = _vmem_capacity_bytes()
    vmem_limit = cap * 3 // 4                      # ~96 MiB v5e/v6e, ~48 MiB v7x

    if fused is None:                              # auto: read x from HBM once
        fused = C * HW * 4 <= cap // 12            # slab (f32) + 4 buffers + temps fit

    # ---- fused fast path ---------------------------------------------------- #
    if fused:
        w0, w1, w2 = _prep_weights_col(params)
        out = pl.pallas_call(
            functools.partial(_fused_kernel, inv_hw=1.0 / HW, C=C, cr=cr),
            out_shape=jax.ShapeDtypeStruct((B, C, HW), x.dtype),
            grid=(B,),
            in_specs=[pl.BlockSpec((1, C, HW), lambda b: (b, 0, 0)),
                      pl.BlockSpec(w0.shape, lambda b: (0, 0)),
                      pl.BlockSpec(w1.shape, lambda b: (0, 0)),
                      pl.BlockSpec(w2.shape, lambda b: (0, 0))],
            out_specs=pl.BlockSpec((1, C, HW), lambda b: (b, 0, 0)),
            compiler_params=pltpu.CompilerParams(
                dimension_semantics=("parallel",),
                vmem_limit_bytes=vmem_limit),
        )(xf, w0, w1, w2)
        return out.reshape(B, C, H, W)

    # ---- 3-pass path --------------------------------------------------------- #
    # NOTE: for extremely large C (C*128*itemsize*4 > vmem_limit) this would need
    # C-tiling as well; typical channel-attention C is far below that.
    w0, w1, w2 = _prep_weights_row(params)
    pool_budget = tile_budget_bytes if tile_budget_bytes else cap // 20   # 2 bufs
    scale_budget = tile_budget_bytes if tile_budget_bytes else cap // 32  # 4 bufs

    # pass 1: global average pool -> (B, C, 1) f32
    thw_p = _choose_hw_tile(C, HW, itemsize, pool_budget)
    pooled = pl.pallas_call(
        functools.partial(_pool_kernel, hw=HW, inv_hw=1.0 / HW),
        out_shape=jax.ShapeDtypeStruct((B, C, 1), jnp.float32),
        grid=(B, pl.cdiv(HW, thw_p)),
        in_specs=[pl.BlockSpec((1, C, thw_p), lambda b, t: (b, 0, t))],
        out_specs=pl.BlockSpec((1, C, 1), lambda b, t: (b, 0, 0)),
        compiler_params=pltpu.CompilerParams(
            dimension_semantics=("parallel", "arbitrary"),
            vmem_limit_bytes=vmem_limit),
    )(xf)

    # pass 2: channel MLP + sigmoid, batched over B, 3 concatenated matmuls
    gate = pl.pallas_call(
        functools.partial(_gate_kernel, C=C, cr=cr),
        out_shape=jax.ShapeDtypeStruct((B, C), jnp.float32),
        grid=(1,),
        in_specs=[pl.BlockSpec((B, C), lambda i: (0, 0)),
                  pl.BlockSpec(w0.shape, lambda i: (0, 0)),
                  pl.BlockSpec(w1.shape, lambda i: (0, 0)),
                  pl.BlockSpec(w2.shape, lambda i: (0, 0))],
        out_specs=pl.BlockSpec((B, C), lambda i: (0, 0)),
        compiler_params=pltpu.CompilerParams(
            dimension_semantics=("arbitrary",)),
    )(pooled.reshape(B, C), w0, w1, w2)

    # pass 3: x * gate, written directly at (B, C, HW) (partial tail block masked)
    thw_s = _choose_hw_tile(C, HW, itemsize, scale_budget)
    out = pl.pallas_call(
        _scale_kernel,
        out_shape=jax.ShapeDtypeStruct((B, C, HW), x.dtype),
        grid=(B, pl.cdiv(HW, thw_s)),
        in_specs=[pl.BlockSpec((1, C, thw_s), lambda b, t: (b, 0, t)),
                  pl.BlockSpec((1, C, 1), lambda b, t: (b, 0, 0))],
        out_specs=pl.BlockSpec((1, C, thw_s), lambda b, t: (b, 0, t)),
        compiler_params=pltpu.CompilerParams(
            dimension_semantics=("parallel", "parallel"),
            vmem_limit_bytes=vmem_limit),
    )(xf, gate.reshape(B, C, 1))

    return out.reshape(B, C, H, W)


# --------------------------------------------------------------------------- #
# Pure-JAX reference (mirrors the PyTorch forward exactly)
# --------------------------------------------------------------------------- #
def cda_reference(x, params):
    p = jnp.mean(x, axis=(2, 3))                           # avg_pool -> (B, C)

    def conv(a, w):                                        # 1x1 conv on (B, Cin)
        return a @ jnp.asarray(w, jnp.float32).T

    y01 = conv(p, params["w01"])
    y02 = conv(p, params["w02"])
    y03 = conv(p, params["w03"])
    y = conv(p, params["w0_1"])
    y = jax.nn.relu(y + y01)
    y12 = conv(y, params["w12"])
    y13 = conv(y, params["w13"])
    y = conv(y, params["w0_2"])
    y = jax.nn.relu(y + y02 + y12)
    y23 = conv(y, params["w23"])
    y = conv(y, params["w0_3"])
    gate = jax.nn.sigmoid(y + y03 + y13 + y23)             # (B, C)
    return x * gate[:, :, None, None]


def init_params(key, channel, reduction):
    cr = channel // reduction
    shapes = {
        "w0_1": (cr, channel),
        "w0_2": (cr, cr),
        "w0_3": (channel, cr),
        "w01": (cr, channel),
        "w02": (cr, channel),
        "w03": (channel, channel),
        "w12": (cr, cr),
        "w13": (channel, cr),
        "w23": (channel, cr),
    }
    params = {}
    for i, (name, shp) in enumerate(sorted(shapes.items())):
        k = jax.random.fold_in(key, i)
        params[name] = 0.1 * jax.random.normal(k, shp, dtype=jnp.float32)
    return params


if __name__ == "__main__":
    key = jax.random.PRNGKey(0)
    run = jax.jit(cda_layer, static_argnames=("fused", "tile_budget_bytes"))

    cases = [
        # (B, C, H, W, reduction, kwargs)
        (2, 32, 16, 16, 4, {}),                                        # fused fast path
        (2, 48, 10, 10, 4, {}),                                        # fused, HW=100 (non-128-multiple)
        (2, 48, 10, 10, 4, dict(fused=False)),                         # 3-pass, masked ragged tail
        (1, 8, 40, 40, 2, dict(fused=False, tile_budget_bytes=8192)),  # 3-pass, multi-tile accumulation
    ]
    for i, (B, C, H, W, red, kw) in enumerate(cases):
        kx, kp = jax.random.split(jax.random.fold_in(key, i))
        x = jax.random.normal(kx, (B, C, H, W), dtype=jnp.float32)
        params = init_params(kp, C, red)

        out = jax.block_until_ready(run(x, params, **kw))
        ref = cda_reference(x, params)

        assert out.shape == (B, C, H, W)
        assert jnp.allclose(out, ref, atol=1e-5, rtol=1e-5), f"mismatch at case {i}: {(B, C, H, W)}"
    print("KERNEL_OK")
</pallas_src>

<mosaic_0001>
module attributes {stable_mosaic.version = 11 : i64} {
  func.func @_fused_kernel(%arg0: i32, %arg1: memref<1x32x256xf32, #tpu.memory_space<vmem>>, %arg2: memref<56x32xf32, #tpu.memory_space<vmem>>, %arg3: memref<48x8xf32, #tpu.memory_space<vmem>>, %arg4: memref<64x8xf32, #tpu.memory_space<vmem>>, %arg5: memref<1x32x256xf32, #tpu.memory_space<vmem>>) attributes {dimension_semantics = [#tpu.dimension_semantics<parallel>], iteration_bounds = array<i64: 2>, scalar_prefetch = 0 : i64, scratch_operands = 0 : i64, tpu.core_type = #tpu.core_type<tc>, window_params = [{transform_indices = @transform_0, window_bounds = array<i64: 1, 32, 256>}, {pipeline_mode = #tpu.pipeline_mode<synchronous>, transform_indices = @transform_1, window_bounds = array<i64: 56, 32>}, {pipeline_mode = #tpu.pipeline_mode<synchronous>, transform_indices = @transform_2, window_bounds = array<i64: 48, 8>}, {pipeline_mode = #tpu.pipeline_mode<synchronous>, transform_indices = @transform_3, window_bounds = array<i64: 64, 8>}, {transform_indices = @transform_4, window_bounds = array<i64: 1, 32, 256>}]} {
    %c0 = arith.constant 0 : index
    %c0_0 = arith.constant 0 : index
    %c0_1 = arith.constant 0 : index
    %0 = vector.load %arg1[%c0, %c0_0, %c0_1] : memref<1x32x256xf32, #tpu.memory_space<vmem>>, vector<1x32x256xf32>
    %cst = arith.constant dense<0.000000e+00> : vector<1x32xf32>
    %1 = vector.multi_reduction <add>, %0, %cst [2] : vector<1x32x256xf32> to vector<1x32xf32>
    %2 = vector.shape_cast %1 : vector<1x32xf32> to vector<1x32x1xf32>
    %3 = vector.shape_cast %2 : vector<1x32x1xf32> to vector<32x1xf32>
    %cst_2 = arith.constant 3.906250e-03 : f32
    %4 = vector.broadcast %cst_2 : f32 to vector<32x1xf32>
    %5 = arith.mulf %3, %4 : vector<32x1xf32>
    %c0_3 = arith.constant 0 : index
    %c0_4 = arith.constant 0 : index
    %6 = vector.load %arg2[%c0_3, %c0_4] : memref<56x32xf32, #tpu.memory_space<vmem>>, vector<56x32xf32>
    %cst_5 = arith.constant dense<0.000000e+00> : vector<56x1xf32>
    %7 = tpu.matmul %6, %5, %cst_5 {dimension_numbers = #tpu.dot_dimension_numbers<[1], [0], [0], [1], [0, 0, 1, 1], [], []>} : vector<56x32xf32>, vector<32x1xf32>, vector<56x1xf32> -> vector<56x1xf32>
    %8 = vector.extract_strided_slice %7 {offsets = [0, 0], sizes = [8, 1], strides = [1, 1]} : vector<56x1xf32> to vector<8x1xf32>
    %9 = vector.extract_strided_slice %7 {offsets = [8, 0], sizes = [8, 1], strides = [1, 1]} : vector<56x1xf32> to vector<8x1xf32>
    %10 = arith.addf %8, %9 : vector<8x1xf32>
    %cst_6 = arith.constant 0.000000e+00 : f32
    %11 = vector.broadcast %cst_6 : f32 to vector<8x1xf32>
    %12 = arith.maximumf %10, %11 : vector<8x1xf32>
    %c0_7 = arith.constant 0 : index
    %c0_8 = arith.constant 0 : index
    %13 = vector.load %arg3[%c0_7, %c0_8] : memref<48x8xf32, #tpu.memory_space<vmem>>, vector<48x8xf32>
    %cst_9 = arith.constant dense<0.000000e+00> : vector<48x1xf32>
    %14 = tpu.matmul %13, %12, %cst_9 {dimension_numbers = #tpu.dot_dimension_numbers<[1], [0], [0], [1], [0, 0, 1, 1], [], []>} : vector<48x8xf32>, vector<8x1xf32>, vector<48x1xf32> -> vector<48x1xf32>
    %15 = vector.extract_strided_slice %14 {offsets = [0, 0], sizes = [8, 1], strides = [1, 1]} : vector<48x1xf32> to vector<8x1xf32>
    %16 = vector.extract_strided_slice %7 {offsets = [16, 0], sizes = [8, 1], strides = [1, 1]} : vector<56x1xf32> to vector<8x1xf32>
    %17 = arith.addf %15, %16 : vector<8x1xf32>
    %18 = vector.extract_strided_slice %14 {offsets = [8, 0], sizes = [8, 1], strides = [1, 1]} : vector<48x1xf32> to vector<8x1xf32>
    %19 = arith.addf %17, %18 : vector<8x1xf32>
    %cst_10 = arith.constant 0.000000e+00 : f32
    %20 = vector.broadcast %cst_10 : f32 to vector<8x1xf32>
    %21 = arith.maximumf %19, %20 : vector<8x1xf32>
    %c0_11 = arith.constant 0 : index
    %c0_12 = arith.constant 0 : index
    %22 = vector.load %arg4[%c0_11, %c0_12] : memref<64x8xf32, #tpu.memory_space<vmem>>, vector<64x8xf32>
    %cst_13 = arith.constant dense<0.000000e+00> : vector<64x1xf32>
    %23 = tpu.matmul %22, %21, %cst_13 {dimension_numbers = #tpu.dot_dimension_numbers<[1], [0], [0], [1], [0, 0, 1, 1], [], []>} : vector<64x8xf32>, vector<8x1xf32>, vector<64x1xf32> -> vector<64x1xf32>
    %24 = vector.extract_strided_slice %23 {offsets = [0, 0], sizes = [32, 1], strides = [1, 1]} : vector<64x1xf32> to vector<32x1xf32>
    %25 = vector.extract_strided_slice %7 {offsets = [24, 0], sizes = [32, 1], strides = [1, 1]} : vector<56x1xf32> to vector<32x1xf32>
    %26 = arith.addf %24, %25 : vector<32x1xf32>
    %27 = vector.extract_strided_slice %14 {offsets = [16, 0], sizes = [32, 1], strides = [1, 1]} : vector<48x1xf32> to vector<32x1xf32>
    %28 = arith.addf %26, %27 : vector<32x1xf32>
    %29 = vector.extract_strided_slice %23 {offsets = [32, 0], sizes = [32, 1], strides = [1, 1]} : vector<64x1xf32> to vector<32x1xf32>
    %30 = arith.addf %28, %29 : vector<32x1xf32>
    %31 = arith.negf %30 : vector<32x1xf32>
    %32 = math.exp %31 : vector<32x1xf32>
    %cst_14 = arith.constant 1.000000e+00 : f32
    %33 = vector.broadcast %cst_14 : f32 to vector<32x1xf32>
    %34 = arith.addf %33, %32 : vector<32x1xf32>
    %35 = arith.divf %33, %34 : vector<32x1xf32>
    %36 = vector.shape_cast %35 : vector<32x1xf32> to vector<1x32x1xf32>
    %37 = vector.broadcast %36 : vector<1x32x1xf32> to vector<1x32x256xf32>
    %38 = arith.mulf %0, %37 : vector<1x32x256xf32>
    %c0_15 = arith.constant 0 : index
    %c0_16 = arith.constant 0 : index
    %c0_17 = arith.constant 0 : index
    %39 = vector.load %arg5[%c0_15, %c0_16, %c0_17] : memref<1x32x256xf32, #tpu.memory_space<vmem>>, vector<1x32x256xf32>
    tpu.vector_store %arg5[%c0_15, %c0_16, %c0_17], %38 {strides = array<i32>} : memref<1x32x256xf32, #tpu.memory_space<vmem>>, vector<1x32x256xf32>,
    return
  }
  func.func @transform_0(%arg0: i32) -> (i32, i32, i32) {
    %c0_i32 = arith.constant 0 : i32
    %c0_i32_0 = arith.constant 0 : i32
    %c0_i32_1 = arith.constant 0 : i32
    return %arg0, %c0_i32, %c0_i32_0 : i32, i32, i32
  }
  func.func @transform_1(%arg0: i32) -> (i32, i32) {
    %c0_i32 = arith.constant 0 : i32
    %c0_i32_0 = arith.constant 0 : i32
    %c0_i32_1 = arith.constant 0 : i32
    return %c0_i32, %c0_i32_0 : i32, i32
  }
  func.func @transform_2(%arg0: i32) -> (i32, i32) {
    %c0_i32 = arith.constant 0 : i32
    %c0_i32_0 = arith.constant 0 : i32
    %c0_i32_1 = arith.constant 0 : i32
    return %c0_i32, %c0_i32_0 : i32, i32
  }
  func.func @transform_3(%arg0: i32) -> (i32, i32) {
    %c0_i32 = arith.constant 0 : i32
    %c0_i32_0 = arith.constant 0 : i32
    %c0_i32_1 = arith.constant 0 : i32
    return %c0_i32, %c0_i32_0 : i32, i32
  }
  func.func @transform_4(%arg0: i32) -> (i32, i32, i32) {
    %c0_i32 = arith.constant 0 : i32
    %c0_i32_0 = arith.constant 0 : i32
    %c0_i32_1 = arith.constant 0 : i32
    return %arg0, %c0_i32, %c0_i32_0 : i32, i32, i32
  }
}

</mosaic_0001>

<llo_original>
// kernel: cda_layer.1
$region0: #{cda_layer.1}
  #allocation0 [shape = 'u32[]', space=smem, size = 0x4, offset = 0x4, fixed_abs, tag = 'smem constant byte address 0x4 - core index']
  #allocation1 [shape = 'u32[72,128]{1,0:T(1,128)}', space=vmem, size = 0x9000, scoped, tag = 'internal scratch']
  %s0 = inlined_call_operand.vmem [shape: f32[2,32,256], index: 0, kind: input, shape index: {}]
  %s1 = inlined_call_operand.vmem [shape: f32[56,32], index: 1, kind: input, shape index: {}]
  %s2 = inlined_call_operand.vmem [shape: f32[48,8], index: 2, kind: input, shape index: {}]
  %s3 = inlined_call_operand.vmem [shape: f32[64,8], index: 3, kind: input, shape index: {}]
  %s4 = inlined_call_operand.vmem [shape: f32[2,32,256], index: 4, kind: output, shape index: {}]
  %s5 = sld [smem:[#allocation0]]
  $region49: #{cda_layer.1} parent=0
    _
  %s7 = ssub.s32 1, %s5
  %s8 = scalar_select 0, %s7, %s5
  loop: start=0, step=1, limit=4
  $region2: #{cda_layer.1} parent=0 // loop_pre_header
    _
  $region3: #{cda_layer.1} parent=0 // loop_header
    %s10 = sphi 0, %s14
    %p11 = scmp.ge.s32.totalorder %s10, 4
    %s20 = sphi 0, %s22
    %s23 = sphi 0, %s20
    %s24 = sphi 0, %s23
    %s40 = sphi 0, %s24
    %s44 = sphi 0, %s44
    %s46 = sphi 0, %s44
    %s47 = sphi 0, %s46
    %s61 = sphi 0, %s47
    %s65 = sphi 0, %s65
    %s67 = sphi 0, %s65
    %s68 = sphi 0, %s67
    %s82 = sphi 0, %s68
    %s86 = sphi 0, %s86
    %s88 = sphi 0, %s86
    %s89 = sphi 0, %s88
    %s103 = sphi 0, %s89
    %s109 = sphi 0, %s111
    %s112 = sphi 0, %s109
    %s113 = sphi 0, %s112
    %s129 = sphi 0, %s113
  $region4: #{cda_layer.1} parent=0 // loop_header_branch
    %13 = sbr.rel (%p11) target = $region8
  $region5: #{cda_layer.1} parent=0 // loop_body
    %s15 = ssub.s32 %s10, 1
    %s16 = ssub.s32 %s10, 2
    %s17 = sadd.s32 %s10, 1
    %s18 = ssub.s32 %s10, %s17
    %p19 = scmp.eq.s32.totalorder %s18, 0
    %s21 = sadd.s32 %s20, 1
    %s22 = scalar_select %p19, %s20, %s21
    %p25 = pneg %p19
    %p26 = scmp.eq.s32.totalorder %s10, 1
    %p27 = por %p25, %p26
    %p28 = scmp.ne.s32.totalorder %s20, %s23
    %p29 = scmp.eq.s32.totalorder %s10, 0
    %p30 = por %p28, %p29
    %p31 = scmp.ne.s32.totalorder %s20, %s23
    %p32 = scmp.eq.s32.totalorder %s15, 1
    %p33 = por %p31, %p32
    %p34 = scmp.ne.s32.totalorder %s23, %s24
    %p35 = scmp.eq.s32.totalorder %s15, 0
    %p36 = por %p34, %p35
    %p37 = scmp.ne.s32.totalorder %s23, %s24
    %p38 = scmp.eq.s32.totalorder %s16, 1
    %p39 = por %p37, %p38
    %p41 = scmp.ne.s32.totalorder %s24, %s40
    %p42 = scmp.eq.s32.totalorder %s16, 0
    %p43 = por %p41, %p42
    %s45 = sadd.s32 %s44, 1
    %p48 = scmp.eq.s32.totalorder %s10, 1
    %p49 = scmp.ne.s32.totalorder %s44, %s46
    %p50 = scmp.eq.s32.totalorder %s10, 0
    %p51 = por %p49, %p50
    %p52 = scmp.ne.s32.totalorder %s44, %s46
    %p53 = scmp.eq.s32.totalorder %s15, 1
    %p54 = por %p52, %p53
    %p55 = scmp.ne.s32.totalorder %s46, %s47
    %p56 = scmp.eq.s32.totalorder %s15, 0
    %p57 = por %p55, %p56
    %p58 = scmp.ne.s32.totalorder %s46, %s47
    %p59 = scmp.eq.s32.totalorder %s16, 1
    %p60 = por %p58, %p59
    %p62 = scmp.ne.s32.totalorder %s47, %s61
    %p63 = scmp.eq.s32.totalorder %s16, 0
    %p64 = por %p62, %p63
    %s66 = sadd.s32 %s65, 1
    %p69 = scmp.eq.s32.totalorder %s10, 1
    %p70 = scmp.ne.s32.totalorder %s65, %s67
    %p71 = scmp.eq.s32.totalorder %s10, 0
    %p72 = por %p70, %p71
    %p73 = scmp.ne.s32.totalorder %s65, %s67
    %p74 = scmp.eq.s32.totalorder %s15, 1
    %p75 = por %p73, %p74
    %p76 = scmp.ne.s32.totalorder %s67, %s68
    %p77 = scmp.eq.s32.totalorder %s15, 0
    %p78 = por %p76, %p77
    %p79 = scmp.ne.s32.totalorder %s67, %s68
    %p80 = scmp.eq.s32.totalorder %s16, 1
    %p81 = por %p79, %p80
    %p83 = scmp.ne.s32.totalorder %s68, %s82
    %p84 = scmp.eq.s32.totalorder %s16, 0
    %p85 = por %p83, %p84
    %s87 = sadd.s32 %s86, 1
    %p90 = scmp.eq.s32.totalorder %s10, 1
    %p91 = scmp.ne.s32.totalorder %s86, %s88
    %p92 = scmp.eq.s32.totalorder %s10, 0
    %p93 = por %p91, %p92
    %p94 = scmp.ne.s32.totalorder %s86, %s88
    %p95 = scmp.eq.s32.totalorder %s15, 1
    %p96 = por %p94, %p95
    %p97 = scmp.ne.s32.totalorder %s88, %s89
    %p98 = scmp.eq.s32.totalorder %s15, 0
    %p99 = por %p97, %p98
    %p100 = scmp.ne.s32.totalorder %s88, %s89
    %p101 = scmp.eq.s32.totalorder %s16, 1
    %p102 = por %p100, %p101
    %p104 = scmp.ne.s32.totalorder %s89, %s103
    %p105 = scmp.eq.s32.totalorder %s16, 0
    %p106 = por %p104, %p105
    %s107 = ssub.s32 %s10, %s17
    %p108 = scmp.eq.s32.totalorder %s107, 0
    %s110 = sadd.s32 %s109, 1
    %s111 = scalar_select %p108, %s109, %s110
    %p114 = pneg %p108
    %p115 = scmp.eq.s32.totalorder %s10, 1
    %p116 = por %p114, %p115
    %p117 = scmp.ne.s32.totalorder %s109, %s112
    %p118 = scmp.eq.s32.totalorder %s10, 0
    %p119 = por %p117, %p118
    %p120 = scmp.ne.s32.totalorder %s109, %s112
    %p121 = scmp.eq.s32.totalorder %s15, 1
    %p122 = por %p120, %p121
    %p123 = scmp.ne.s32.totalorder %s112, %s113
    %p124 = scmp.eq.s32.totalorder %s15, 0
    %p125 = por %p123, %p124
    %p126 = scmp.ne.s32.totalorder %s112, %s113
    %p127 = scmp.eq.s32.totalorder %s16, 1
    %p128 = por %p126, %p127
    %p130 = scmp.ne.s32.totalorder %s113, %s129
    %p131 = scmp.eq.s32.totalorder %s16, 0
    %p132 = por %p130, %p131
    %p133 = scmp.le.s32.totalorder 1, %s10
    %p134 = scmp.lt.s32.totalorder %s10, 3
    %p135 = pnand %p133, %p134
    %p136 = pneg %p135
    // Predicated region
    $region9: #{cda_layer.1} parent=5 // pred_check
      _
    $region10: #{cda_layer.1} parent=5 // pred_check_branch
      %138 = sbr.rel (%p135) target = $region12
    $region11: #{cda_layer.1} parent=5 // pred_region
      %s139 = ssub.s32 %s10, 1
      // Predicated region
      $region13: #{cda_layer.1} parent=11 // pred_check
        %p140 = pneg %p57
      $region14: #{cda_layer.1} parent=11 // pred_check_branch
        %142 = sbr.rel (%p140) target = $region16
      $region15: #{cda_layer.1} parent=11 // pred_region
        _
      $region16: #{cda_layer.1} parent=11 // pred_fallthru
        _
      // Predicated region
      $region17: #{cda_layer.1} parent=11 // pred_check
        %p143 = pneg %p78
      $region18: #{cda_layer.1} parent=11 // pred_check_branch
        %145 = sbr.rel (%p143) target = $region20
      $region19: #{cda_layer.1} parent=11 // pred_region
        _
      $region20: #{cda_layer.1} parent=11 // pred_fallthru
        _
      // Predicated region
      $region21: #{cda_layer.1} parent=11 // pred_check
        %p146 = pneg %p99
      $region22: #{cda_layer.1} parent=11 // pred_check_branch
        %148 = sbr.rel (%p146) target = $region24
      $region23: #{cda_layer.1} parent=11 // pred_region
        _
      $region24: #{cda_layer.1} parent=11 // pred_fallthru
        _
    $region12: #{cda_layer.1} parent=5 // pred_fallthru
      _
    %p149 = scmp.lt.s32.totalorder %s10, 2
    // Predicated region
    $region25: #{cda_layer.1} parent=5 // pred_check
      %p150 = pneg %p149
    $region26: #{cda_layer.1} parent=5 // pred_check_branch
      %152 = sbr.rel (%p150) target = $region28
    $region27: #{cda_layer.1} parent=5 // pred_region
      // Predicated region
      $region29: #{cda_layer.1} parent=27 // pred_check
        %p153 = pneg %p30
      $region30: #{cda_layer.1} parent=27 // pred_check_branch
        %155 = sbr.rel (%p153) target = $region32
      $region31: #{cda_layer.1} parent=27 // pred_region
        %p156 = scmp.lt.s32.totalorder %s10, 1
        %s157 = scalar_select %p156, %s10, 1
        %s158 = smul.addr %s157, 8
        %s159 = smul.addr %s158, 8
        %s160 = scalar_lea.vmem %s0, %s159
      $region32: #{cda_layer.1} parent=27 // pred_fallthru
        _
    $region28: #{cda_layer.1} parent=5 // pred_fallthru
      _
    %p161 = scmp.le.s32.totalorder 1, %s10
    %p162 = scmp.lt.s32.totalorder %s10, 3
    %p163 = pnand %p161, %p162
    %p164 = pneg %p163
    // Predicated region
    $region33: #{cda_layer.1} parent=5 // pred_check
      _
    $region34: #{cda_layer.1} parent=5 // pred_check_branch
      %166 = sbr.rel (%p163) target = $region36
    $region35: #{cda_layer.1} parent=5 // pred_region
      %s167 = ssub.s32 %s10, 1
      %p168 = scmp.lt.s32.totalorder %s15, 1
      %s169 = scalar_select %p168, %s15, 1
      %s170 = smul.addr %s169, 8
      %s171 = smul.addr %s170, 8
      %s172 = scalar_lea.vmem %s0, %s171
      %p173 = pneg %p36
      %p174 = pneg %p33
      %p175 = pneg %p57
      %p176 = pneg %p54
      %p177 = pneg %p78
      %p178 = pneg %p75
      %p179 = pneg %p99
      %p180 = pneg %p96
      %p181 = pneg %p125
      %p182 = pneg %p122
      %p183 = scmp.lt.s32.totalorder %s15, 1
      %s184 = scalar_select %p183, %s15, 1
      %s185 = smul.addr %s184, 8
      %s186 = smul.addr %s185, 8
      %s187 = scalar_lea.vmem %s4, %s186
      %p188 = scmp.lt.s32.totalorder %s15, 1
      %s189 = scalar_select %p188, %s15, 1
      %s190 = smul.addr %s189, 8
      %s191 = smul.addr %s190, 8
      %s192 = scalar_lea.vmem %s0, %s191
      %p193 = scmp.lt.s32.totalorder %s15, 1
      %s194 = scalar_select %p193, %s15, 1
      %s195 = smul.addr %s194, 8
      %s196 = smul.addr %s195, 8
      %s197 = scalar_lea.vmem %s4, %s196
      %v198 = vld [vmem:[%s192] sm:$0xff]
      %v199 = vld [vmem:[%s192 + $0x8] sm:$0xff]
      %v200 = vld [vmem:[%s192 + $0x10] sm:$0xff]
      %v201 = vld [vmem:[%s192 + $0x18] sm:$0xff]
      %v202 = vld [vmem:[%s192 + $0x20] sm:$0xff]
      %v203 = vld [vmem:[%s192 + $0x28] sm:$0xff]
      %v204 = vld [vmem:[%s192 + $0x30] sm:$0xff]
      %v205 = vld [vmem:[%s192 + $0x38] sm:$0xff]
      %v206 = vadd.f32 %v198, %v199
      %207 = vadd.xlane.f32.xlu0 %v206
      %v208 = vpop.xlane.xlu0 %207
      %v209 = vadd.f32 %v200, %v201
      %210 = vadd.xlane.f32.xlu0 %v209
      %v211 = vpop.xlane.xlu0 %210
      %v212 = vadd.f32 %v202, %v203
      %213 = vadd.xlane.f32.xlu0 %v212
      %v214 = vpop.xlane.xlu0 %213
      %v215 = vadd.f32 %v204, %v205
      %216 = vadd.xlane.f32.xlu0 %v215
      %v217 = vpop.xlane.xlu0 %216
      %v218 = vmul.f32 %v208, 0.00390625
      %v219 = vmul.f32 %v211, 0.00390625
      %v220 = vmul.f32 %v214, 0.00390625
      %v221 = vmul.f32 %v217, 0.00390625
      %v222 = vld [vmem:[%s1] sm:$0xff]
      %v223 = vld [vmem:[%s1 + $0x8] sm:$0xff]
      %v224 = vld [vmem:[%s1 + $0x10] sm:$0xff]
      %v225 = vld [vmem:[%s1 + $0x18] sm:$0xff]
      %v226 = vld [vmem:[%s1 + $0x20] sm:$0xff]
      %v227 = vld [vmem:[%s1 + $0x28] sm:$0xff]
      %v228 = vld [vmem:[%s1 + $0x30] sm:$0xff]
      %vm229 = vcmask 261120
      %v231 = vsel %vm229, %v222, 0
      %v234 = vsel %vm229, %v223, 0
      %v237 = vsel %vm229, %v224, 0
      %v240 = vsel %vm229, %v225, 0
      %v243 = vsel %vm229, %v226, 0
      %v246 = vsel %vm229, %v227, 0
      %v249 = vsel %vm229, %v228, 0
      %251 = vmatpush.msra.mxu0 0.0
      %252 = vmatpush.msra.mxu0 0.0
      %253 = vmatpush.msra.mxu0 0.0
      %254 = vmatpush.msra.mxu0 0.0
      %255 = vmatpush.msra.mxu0 0.0
      %256 = vmatpush.msra.mxu0 0.0
      %257 = vmatpush.msra.mxu0 0.0
      %258 = vmatpush.msra.mxu0 0.0
      %259 = vmatpush.msra.mxu0 0.0
      %260 = vmatpush.msra.mxu0 0.0
      %261 = vmatpush.msra.mxu0 0.0
      %262 = vmatpush.msra.mxu0 0.0
      %263 = vmatpush.msra.mxu0 %v221
      %264 = vmatpush.msra.mxu0 %v220
      %265 = vmatpush.msra.mxu0 %v219
      %266 = vmatpush.msra.mxu0 %v218
      %267 = vmatmul.f32.gmra.mxu0 %v231
      %v268 = vpop.f32.mrf.mxu0
      %v269 = vadd.f32 0.0, %v268
      %270 = vmatmul.f32.gmra.mxu0 %v234
      %v271 = vpop.f32.mrf.mxu0
      %v272 = vadd.f32 0.0, %v271
      %273 = vmatmul.f32.gmra.mxu0 %v237
      %v274 = vpop.f32.mrf.mxu0
      %v275 = vadd.f32 0.0, %v274
      %276 = vmatmul.f32.gmra.mxu0 %v240
      %v277 = vpop.f32.mrf.mxu0
      %v278 = vadd.f32 0.0, %v277
      %279 = vmatmul.f32.gmra.mxu0 %v243
      %v280 = vpop.f32.mrf.mxu0
      %v281 = vadd.f32 0.0, %v280
      %282 = vmatmul.f32.gmra.mxu0 %v246
      %v283 = vpop.f32.mrf.mxu0
      %v284 = vadd.f32 0.0, %v283
      %285 = vmatmul.f32.gmra.mxu0 %v249
      %v286 = vpop.f32.mrf.mxu0
      %v287 = vadd.f32 0.0, %v286
      %288 = vdwg.mxu0
      %v289 = vadd.f32 %v269, %v272
      %v290 = vmax.f32 %v289, 0.0
      %v291 = vld [vmem:[%s2] sm:$0xff]
      %v292 = vld [vmem:[%s2 + $0x8] sm:$0xff]
      %v293 = vld [vmem:[%s2 + $0x10] sm:$0xff]
      %v294 = vld [vmem:[%s2 + $0x18] sm:$0xff]
      %v295 = vld [vmem:[%s2 + $0x20] sm:$0xff]
      %v296 = vld [vmem:[%s2 + $0x28] sm:$0xff]
      %vm297 = vcmask 64512
      %v299 = vsel %vm297, %v291, 0
      %v302 = vsel %vm297, %v292, 0
      %v305 = vsel %vm297, %v293, 0
      %v308 = vsel %vm297, %v294, 0
      %v311 = vsel %vm297, %v295, 0
      %v314 = vsel %vm297, %v296, 0
      %316 = vmatpush.msra.mxu0 0.0
      %317 = vmatpush.msra.mxu0 0.0
      %318 = vmatpush.msra.mxu0 0.0
      %319 = vmatpush.msra.mxu0 0.0
      %320 = vmatpush.msra.mxu0 0.0
      %321 = vmatpush.msra.mxu0 0.0
      %322 = vmatpush.msra.mxu0 0.0
      %323 = vmatpush.msra.mxu0 0.0
      %324 = vmatpush.msra.mxu0 0.0
      %325 = vmatpush.msra.mxu0 0.0
      %326 = vmatpush.msra.mxu0 0.0
      %327 = vmatpush.msra.mxu0 0.0
      %328 = vmatpush.msra.mxu0 0.0
      %329 = vmatpush.msra.mxu0 0.0
      %330 = vmatpush.msra.mxu0 0.0
      %331 = vmatpush.msra.mxu0 %v290
      %332 = vmatmul.f32.gmra.mxu0 %v299
      %v333 = vpop.f32.mrf.mxu0
      %v334 = vadd.f32 0.0, %v333
      %335 = vmatmul.f32.gmra.mxu0 %v302
      %v336 = vpop.f32.mrf.mxu0
      %v337 = vadd.f32 0.0, %v336
      %338 = vmatmul.f32.gmra.mxu0 %v305
      %v339 = vpop.f32.mrf.mxu0
      %v340 = vadd.f32 0.0, %v339
      %341 = vmatmul.f32.gmra.mxu0 %v308
      %v342 = vpop.f32.mrf.mxu0
      %v343 = vadd.f32 0.0, %v342
      %344 = vmatmul.f32.gmra.mxu0 %v311
      %v345 = vpop.f32.mrf.mxu0
      %v346 = vadd.f32 0.0, %v345
      %347 = vmatmul.f32.gmra.mxu0 %v314
      %v348 = vpop.f32.mrf.mxu0
      %v349 = vadd.f32 0.0, %v348
      %350 = vdwg.mxu0
      %v351 = vadd.f32 %v334, %v275
      %v352 = vadd.f32 %v351, %v337
      %v353 = vmax.f32 %v352, 0.0
      %v354 = vld [vmem:[%s3] sm:$0xff]
      %v355 = vld [vmem:[%s3 + $0x8] sm:$0xff]
      %v356 = vld [vmem:[%s3 + $0x10] sm:$0xff]
      %v357 = vld [vmem:[%s3 + $0x18] sm:$0xff]
      %v358 = vld [vmem:[%s3 + $0x20] sm:$0xff]
      %v359 = vld [vmem:[%s3 + $0x28] sm:$0xff]
      %v360 = vld [vmem:[%s3 + $0x30] sm:$0xff]
      %v361 = vld [vmem:[%s3 + $0x38] sm:$0xff]
      %v363 = vsel %vm297, %v354, 0
      %v366 = vsel %vm297, %v355, 0
      %v369 = vsel %vm297, %v356, 0
      %v372 = vsel %vm297, %v357, 0
      %v375 = vsel %vm297, %v358, 0
      %v378 = vsel %vm297, %v359, 0
      %v381 = vsel %vm297, %v360, 0
      %v384 = vsel %vm297, %v361, 0
      %386 = vmatpush.msra.mxu0 0.0
      %387 = vmatpush.msra.mxu0 0.0
      %388 = vmatpush.msra.mxu0 0.0
      %389 = vmatpush.msra.mxu0 0.0
      %390 = vmatpush.msra.mxu0 0.0
      %391 = vmatpush.msra.mxu0 0.0
      %392 = vmatpush.msra.mxu0 0.0
      %393 = vmatpush.msra.mxu0 0.0
      %394 = vmatpush.msra.mxu0 0.0
      %395 = vmatpush.msra.mxu0 0.0
      %396 = vmatpush.msra.mxu0 0.0
      %397 = vmatpush.msra.mxu0 0.0
      %398 = vmatpush.msra.mxu0 0.0
      %399 = vmatpush.msra.mxu0 0.0
      %400 = vmatpush.msra.mxu0 0.0
      %401 = vmatpush.msra.mxu0 %v353
      %402 = vmatmul.f32.gmra.mxu0 %v363
      %v403 = vpop.f32.mrf.mxu0
      %v404 = vadd.f32 0.0, %v403
      %405 = vmatmul.f32.gmra.mxu0 %v366
      %v406 = vpop.f32.mrf.mxu0
      %v407 = vadd.f32 0.0, %v406
      %408 = vmatmul.f32.gmra.mxu0 %v369
      %v409 = vpop.f32.mrf.mxu0
      %v410 = vadd.f32 0.0, %v409
      %411 = vmatmul.f32.gmra.mxu0 %v372
      %v412 = vpop.f32.mrf.mxu0
      %v413 = vadd.f32 0.0, %v412
      %414 = vmatmul.f32.gmra.mxu0 %v375
      %v415 = vpop.f32.mrf.mxu0
      %v416 = vadd.f32 0.0, %v415
      %417 = vmatmul.f32.gmra.mxu0 %v378
      %v418 = vpop.f32.mrf.mxu0
      %v419 = vadd.f32 0.0, %v418
      %420 = vmatmul.f32.gmra.mxu0 %v381
      %v421 = vpop.f32.mrf.mxu0
      %v422 = vadd.f32 0.0, %v421
      %423 = vmatmul.f32.gmra.mxu0 %v384
      %v424 = vpop.f32.mrf.mxu0
      %v425 = vadd.f32 0.0, %v424
      %426 = vdwg.mxu0
      %v427 = vadd.f32 %v404, %v278
      %v428 = vadd.f32 %v407, %v281
      %v429 = vadd.f32 %v410, %v284
      %v430 = vadd.f32 %v413, %v287
      %v431 = vadd.f32 %v427, %v340
      %v432 = vadd.f32 %v428, %v343
      %v433 = vadd.f32 %v429, %v346
      %v434 = vadd.f32 %v430, %v349
      %v435 = vadd.f32 %v431, %v416
      %v436 = vadd.f32 %v432, %v419
      %v437 = vadd.f32 %v433, %v422
      %v438 = vadd.f32 %v434, %v425
      %v439 = vxor.u32 %v435, 2147483648
      %v440 = vxor.u32 %v436, 2147483648
      %v441 = vxor.u32 %v437, 2147483648
      %v442 = vxor.u32 %v438, 2147483648
      %v443 = vmul.f32 %v439, 1.442695
      %v444 = vpow.pop %v443
      %v445 = vmul.f32 %v440, 1.442695
      %v446 = vpow.pop %v445
      %v447 = vmul.f32 %v441, 1.442695
      %v448 = vpow.pop %v447
      %v449 = vmul.f32 %v442, 1.442695
      %v450 = vpow.pop %v449
      %v451 = vadd.f32 %v444, 1.0
      %v452 = vadd.f32 %v446, 1.0
      %v453 = vadd.f32 %v448, 1.0
      %v454 = vadd.f32 %v450, 1.0
      %v455 = vrcp.pop %v451
      %v456 = vmul.f32 %v451, %v455
      %v457 = vsub.f32 1.0, %v456
      %v458 = vmul.f32 %v455, %v457
      %v459 = vadd.f32 %v455, %v458
      %vm460 = vweird.f32 %v451
      %vm461 = vweird.f32 %v455
      %vm462 = vmor %vm460, %vm461
      %v463 = vsel %vm462, %v455, %v459
      %v464 = vand.u32 2147483647, %v451
      %vm465 = vcmp.eq.f32.partialorder %v464, 8.507059e+37
      %v466 = vand.u32 %v451, 2147483648
      %v467 = vor.u32 1.1754944e-38, %v466
      %v468 = vsel %vm465, %v467, %v463
      %v469 = vmul.f32 1.0, %v468
      %v470 = vrcp.pop %v452
      %v471 = vmul.f32 %v452, %v470
      %v472 = vsub.f32 1.0, %v471
      %v473 = vmul.f32 %v470, %v472
      %v474 = vadd.f32 %v470, %v473
      %vm475 = vweird.f32 %v452
      %vm476 = vweird.f32 %v470
      %vm477 = vmor %vm475, %vm476
      %v478 = vsel %vm477, %v470, %v474
      %v479 = vand.u32 2147483647, %v452
      %vm480 = vcmp.eq.f32.partialorder %v479, 8.507059e+37
      %v481 = vand.u32 %v452, 2147483648
      %v482 = vor.u32 1.1754944e-38, %v481
      %v483 = vsel %vm480, %v482, %v478
      %v484 = vmul.f32 1.0, %v483
      %v485 = vrcp.pop %v453
      %v486 = vmul.f32 %v453, %v485
      %v487 = vsub.f32 1.0, %v486
      %v488 = vmul.f32 %v485, %v487
      %v489 = vadd.f32 %v485, %v488
      %vm490 = vweird.f32 %v453
      %vm491 = vweird.f32 %v485
      %vm492 = vmor %vm490, %vm491
      %v493 = vsel %vm492, %v485, %v489
      %v494 = vand.u32 2147483647, %v453
      %vm495 = vcmp.eq.f32.partialorder %v494, 8.507059e+37
      %v496 = vand.u32 %v453, 2147483648
      %v497 = vor.u32 1.1754944e-38, %v496
      %v498 = vsel %vm495, %v497, %v493
      %v499 = vmul.f32 1.0, %v498
      %v500 = vrcp.pop %v454
      %v501 = vmul.f32 %v454, %v500
      %v502 = vsub.f32 1.0, %v501
      %v503 = vmul.f32 %v500, %v502
      %v504 = vadd.f32 %v500, %v503
      %vm505 = vweird.f32 %v454
      %vm506 = vweird.f32 %v500
      %vm507 = vmor %vm505, %vm506
      %v508 = vsel %vm507, %v500, %v504
      %v509 = vand.u32 2147483647, %v454
      %vm510 = vcmp.eq.f32.partialorder %v509, 8.507059e+37
      %v511 = vand.u32 %v454, 2147483648
      %v512 = vor.u32 1.1754944e-38, %v511
      %v513 = vsel %vm510, %v512, %v508
      %v514 = vmul.f32 1.0, %v513
      %516 = vset.pattern.permute.xlu0 0
      %517 = vperm.xlu0 %516, %v469
      %v518 = vpop.permute.xlu0 %517
      %521 = vset.pattern.permute.xlu0 0
      %522 = vperm.xlu0 %521, %v484
      %v523 = vpop.permute.xlu0 %522
      %526 = vset.pattern.permute.xlu0 0
      %527 = vperm.xlu0 %526, %v499
      %v528 = vpop.permute.xlu0 %527
      %531 = vset.pattern.permute.xlu0 0
      %532 = vperm.xlu0 %531, %v514
      %v533 = vpop.permute.xlu0 %532
      %v535 = vmul.f32 %v198, %v518
      %v536 = vmul.f32 %v199, %v518
      %v537 = vmul.f32 %v200, %v523
      %v538 = vmul.f32 %v201, %v523
      %v539 = vmul.f32 %v202, %v528
      %v540 = vmul.f32 %v203, %v528
      %v541 = vmul.f32 %v204, %v533
      %v542 = vmul.f32 %v205, %v533
      %543 = vst [vmem:[%s197] sm:$0xff] %v535
      %544 = vst [vmem:[%s197 + $0x8] sm:$0xff] %v536
      %545 = vst [vmem:[%s197 + $0x10] sm:$0xff] %v537
      %546 = vst [vmem:[%s197 + $0x18] sm:$0xff] %v538
      %547 = vst [vmem:[%s197 + $0x20] sm:$0xff] %v539
      %548 = vst [vmem:[%s197 + $0x28] sm:$0xff] %v540
      %549 = vst [vmem:[%s197 + $0x30] sm:$0xff] %v541
      %550 = vst [vmem:[%s197 + $0x38] sm:$0xff] %v542
      %p551 = scmp.lt.s32.totalorder %s15, 1
      %s552 = scalar_select %p551, %s15, 1
      %s553 = smul.addr %s552, 8
      %s554 = smul.addr %s553, 8
      %s555 = scalar_lea.vmem %s4, %s554
      // Predicated region
      $region37: #{cda_layer.1} parent=35 // pred_check
        %p556 = pneg %p122
      $region38: #{cda_layer.1} parent=35 // pred_check_branch
        %558 = sbr.rel (%p556) target = $region40
      $region39: #{cda_layer.1} parent=35 // pred_region
        _
      $region40: #{cda_layer.1} parent=35 // pred_fallthru
        _
    $region36: #{cda_layer.1} parent=5 // pred_fallthru
      _
    %p559 = scmp.le.s32.totalorder 2, %s10
    // Predicated region
    $region41: #{cda_layer.1} parent=5 // pred_check
      %p560 = pneg %p559
    $region42: #{cda_layer.1} parent=5 // pred_check_branch
      %562 = sbr.rel (%p560) target = $region44
    $region43: #{cda_layer.1} parent=5 // pred_region
      %s563 = ssub.s32 %s10, 2
      // Predicated region
      $region45: #{cda_layer.1} parent=43 // pred_check
        %p564 = pneg %p128
      $region46: #{cda_layer.1} parent=43 // pred_check_branch
        %566 = sbr.rel (%p564) target = $region48
      $region47: #{cda_layer.1} parent=43 // pred_region
        %p567 = scmp.lt.s32.totalorder %s16, 1
        %s568 = scalar_select %p567, %s16, 1
        %s569 = smul.addr %s568, 8
        %s570 = smul.addr %s569, 8
        %s571 = scalar_lea.vmem %s4, %s570
      $region48: #{cda_layer.1} parent=43 // pred_fallthru
        _
    $region44: #{cda_layer.1} parent=5 // pred_fallthru
      _
  $region6: #{cda_layer.1} parent=0 // loop_footer
    %s14 = sadd.s32 1, %s10
  $region7: #{cda_layer.1} parent=0 // loop_footer_branch
    %9 = sbr.rel target = $region3
  $region8: #{cda_layer.1} parent=0 // loop_exit
    _

</llo_original>
